<compile_context>
chip_gen: v6e
topology: v6e:2x2x1
jax: 0.10.0
libtpu: 0.0.40
codegen_flags: <defaults>
</compile_context>

<pallas_src>
import functools

import jax
import jax.numpy as jnp
from jax import lax
from jax.experimental import pallas as pl
from jax.experimental.pallas import tpu as pltpu

ACT_PAD = 128      # padded action (lane) width
HID_PAD = 128      # padded parser-summary width


def _rnng_forward_kernel(num_actions,
                         x_ref, w1_ref, b1_ref, w2_ref, b2_ref, bits_ref,
                         out_ref):
    """Fused summary-MLP + action projection + masked log_softmax.

    x:    (TB, 3H)           bf16, packed [stack | buffer | history] LSTM tops
    w1:   (3H, HID_PAD)      bf16, lstms2summary weight (out dim zero-padded)
    b1:   (1, HID_PAD)       f32,  lstms2summary bias (zero-padded)
    w2:   (HID_PAD, ACT_PAD) bf16, summary2actions weight (zero-padded)
    b2:   (1, ACT_PAD)       f32,  summary2actions bias (zero-padded)
    bits: (TB, 1)            int32, bit a set => action a illegal
    out:  (TB, ACT_PAD)      f32 log-probabilities (first num_actions lanes valid)
    """
    # lstms2summary: Dropout(p=0) -> Linear -> ReLU, as one K=3H MXU matmul.
    summary = jnp.dot(x_ref[...], w1_ref[...],
                      preferred_element_type=jnp.float32) + b1_ref[...]
    summary = jnp.maximum(summary, 0.0)                            # f32 (TB, HID_PAD)

    # summary2actions.
    logits = jnp.dot(summary.astype(w2_ref.dtype), w2_ref[...],
                     preferred_element_type=jnp.float32) + b2_ref[...]

    # Expand the per-row illegal-action bitmask in-kernel (cheap VPU work that
    # hides under MXU/EUP) and kill padded lanes.  Illegal real actions get
    # -inf, matching the torch restriction addend; the parser guarantees >= 1
    # legal action per live state, so the row max stays finite.
    lane = lax.broadcasted_iota(jnp.int32, logits.shape, 1)
    illegal = ((bits_ref[...] >> jnp.minimum(lane, 31)) & 1) != 0
    invalid = illegal | (lane >= num_actions)
    logits = jnp.where(invalid, -jnp.inf, logits)

    # Row-wise log_softmax (all f32).
    m = jnp.max(logits, axis=-1, keepdims=True)
    lse = jnp.log(jnp.sum(jnp.exp(logits - m), axis=-1, keepdims=True)) + m
    out_ref[...] = logits - lse


def prepare_params(w1, b1, w2, b2):
    """Once-per-model weight prep (pad to lane width, cast to bf16).

    w1: (3H, H) lstms2summary.linear weight, stored (in_features, out_features)
    b1: (H,)    lstms2summary.linear bias
    w2: (H, A)  summary2actions weight, stored (in_features, out_features)
    b2: (A,)    summary2actions bias
    """
    three_h, hidden = w1.shape
    num_actions = w2.shape[1]
    assert three_h == 3 * hidden
    assert num_actions <= 32   # single int32 bitmask word per row
    return {
        "num_actions": num_actions,
        "hidden_dim": hidden,
        "w1": jnp.pad(w1, ((0, 0), (0, HID_PAD - hidden))).astype(jnp.bfloat16),
        "b1": jnp.pad(b1, (0, HID_PAD - hidden)).reshape(1, HID_PAD).astype(jnp.float32),
        "w2": jnp.pad(w2, ((0, HID_PAD - hidden),
                           (0, ACT_PAD - num_actions))).astype(jnp.bfloat16),
        "b2": jnp.pad(b2, (0, ACT_PAD - num_actions)).reshape(1, ACT_PAD).astype(jnp.float32),
    }


def rnng_forward_batched(stack_top, buffer_top, history_top, illegal_bits,
                         params, *, block_b=None):
    """Forward for B parser states / beam hypotheses at once.

    stack/buffer/history_top: (B, H) f32   StackLSTM top vectors
    illegal_bits:             (B, 1) int32 bit a set => action a illegal
    params:                   output of prepare_params()
    Returns (B, ACT_PAD) f32 log-probabilities; lanes [:num_actions] are valid.
    """
    B, H = stack_top.shape
    A = params["num_actions"]
    assert H == params["hidden_dim"]
    assert illegal_bits.shape == (B, 1)

    # Pack the three LSTM tops into one lane-dense K=3H LHS (single fused
    # concat+cast XLA op on the per-transition path).
    x = jnp.concatenate([stack_top, buffer_top, history_top],
                        axis=-1).astype(jnp.bfloat16)                  # (B, 3H)

    if block_b is None:
        # Whole problem is <1 MiB of VMEM: use one tile unless B is large
        # enough that splitting across v7x's two TensorCores pays for the
        # duplicated weight copy and per-step overhead.
        block_b = B if B <= 1024 else 512
    n_tiles = pl.cdiv(B, block_b)

    def batch_spec(last):
        return pl.BlockSpec((block_b, last), lambda i: (i, 0),
                            memory_space=pltpu.MemorySpace.VMEM)

    def const_spec(shp):
        return pl.BlockSpec(shp, lambda i: (0, 0),
                            memory_space=pltpu.MemorySpace.VMEM)

    cost = pl.CostEstimate(
        flops=2 * B * (3 * H * HID_PAD + HID_PAD * ACT_PAD),
        transcendentals=B * (ACT_PAD + 1),
        bytes_accessed=(2 * B * 3 * H                                   # x (bf16)
                        + 2 * (3 * H * HID_PAD + HID_PAD * ACT_PAD)     # weights (bf16)
                        + 4 * (HID_PAD + ACT_PAD)                       # biases
                        + 4 * B                                         # bitmask
                        + 4 * B * ACT_PAD),                             # output
    )

    kernel = functools.partial(_rnng_forward_kernel, A)

    return pl.pallas_call(
        kernel,
        out_shape=jax.ShapeDtypeStruct((B, ACT_PAD), jnp.float32),
        grid=(n_tiles,),
        in_specs=[batch_spec(3 * H),
                  const_spec((3 * H, HID_PAD)), const_spec((1, HID_PAD)),
                  const_spec((HID_PAD, ACT_PAD)), const_spec((1, ACT_PAD)),
                  batch_spec(1)],
        out_specs=batch_spec(ACT_PAD),
        compiler_params=pltpu.CompilerParams(
            dimension_semantics=("parallel",) if n_tiles > 1 else ("arbitrary",)),
        cost_estimate=cost,
    )(x, params["w1"], params["b1"], params["w2"], params["b2"], illegal_bits)


def reference_forward(xs, xb, xh, w1, b1, w2, b2, illegal_mask):
    x = jnp.concatenate([xs, xb, xh], axis=-1)                          # (B, 3H)
    summary = jnp.maximum(x @ w1 + b1, 0.0)
    logits = summary @ w2 + b2 + illegal_mask
    return jax.nn.log_softmax(logits, axis=-1)


if __name__ == "__main__":
    # Small shapes consistent with the module (scaled down): hidden_dim=32,
    # num_actions=8 (SHIFT, REDUCE, a few NT(...)), batch of 256 parser states.
    hidden_dim = 32
    num_actions = 8
    batch = 256

    key = jax.random.PRNGKey(0)
    ks = jax.random.split(key, 8)

    # Synthetic LSTM tops (stack_lstm.top / buffer_lstm.top / history_lstm.top).
    stack_top = jax.random.normal(ks[0], (batch, hidden_dim), jnp.float32)
    buffer_top = jax.random.normal(ks[1], (batch, hidden_dim), jnp.float32)
    history_top = jax.random.normal(ks[2], (batch, hidden_dim), jnp.float32)

    # lstms2summary.linear: Linear(3H, H); stored transposed (in, out).
    w1 = jax.random.normal(ks[3], (3 * hidden_dim, hidden_dim), jnp.float32) * 0.05
    b1 = jnp.ones((hidden_dim,), jnp.float32)            # init.constant(bias, 1.0)
    # summary2actions: Linear(H, A); stored transposed (in, out).
    w2 = jax.random.normal(ks[4], (hidden_dim, num_actions), jnp.float32) * 0.05
    b2 = jnp.zeros((num_actions,), jnp.float32)          # init.constant(bias, 0.0)

    # Per-state illegal-action restriction (from _get_illegal_action_ids()) as
    # a compact bitmask: bit a set => action a illegal.  The parser guarantees
    # at least one legal action per live state (keep action 0 legal per row).
    illegal = jax.random.uniform(ks[5], (batch, num_actions)) < 0.3
    illegal = illegal.at[:, 0].set(False)
    illegal_bits = jnp.sum(
        illegal.astype(jnp.int32) << jnp.arange(num_actions, dtype=jnp.int32),
        axis=-1, keepdims=True).astype(jnp.int32)                       # (B, 1)

    params = prepare_params(w1, b1, w2, b2)              # once per model, not per step

    out_padded = rnng_forward_batched(stack_top, buffer_top, history_top,
                                      illegal_bits, params)
    out_padded = jax.block_until_ready(out_padded)
    out = out_padded[:, :num_actions]   # test-side view; consumers may index lanes directly

    # f32 reference with the exact module math.
    illegal_mask = jnp.where(illegal, -jnp.inf, 0.0).astype(jnp.float32)
    ref = reference_forward(stack_top, buffer_top, history_top,
                            w1, b1, w2, b2, illegal_mask)

    assert out.shape == (batch, num_actions)
    # Illegal actions are exactly -inf in both kernel output and reference.
    assert bool(jnp.all(jnp.isneginf(out) == jnp.isneginf(ref)))
    finite = jnp.isfinite(ref)
    # bf16 streamed operands + f32 accumulation: tolerance widened vs pure f32.
    assert bool(jnp.allclose(jnp.where(finite, out, 0.0),
                             jnp.where(finite, ref, 0.0),
                             atol=2e-2, rtol=2e-2)), "mismatch vs JAX reference"

    print("KERNEL_OK")
</pallas_src>

<mosaic_0001>
module attributes {stable_mosaic.version = 11 : i64} {
  func.func @_rnng_forward_kernel(%arg0: i32, %arg1: memref<256x96xbf16, #tpu.memory_space<vmem>>, %arg2: memref<96x128xbf16, #tpu.memory_space<vmem>>, %arg3: memref<1x128xf32, #tpu.memory_space<vmem>>, %arg4: memref<128x128xbf16, #tpu.memory_space<vmem>>, %arg5: memref<1x128xf32, #tpu.memory_space<vmem>>, %arg6: memref<256x1xi32, #tpu.memory_space<vmem>>, %arg7: memref<256x128xf32, #tpu.memory_space<vmem>>) attributes {dimension_semantics = [#tpu.dimension_semantics<arbitrary>], iteration_bounds = array<i64: 1>, scalar_prefetch = 0 : i64, scratch_operands = 0 : i64, tpu.core_type = #tpu.core_type<tc>, window_params = [{transform_indices = @transform_0, window_bounds = array<i64: 256, 96>}, {pipeline_mode = #tpu.pipeline_mode<synchronous>, transform_indices = @transform_1, window_bounds = array<i64: 96, 128>}, {pipeline_mode = #tpu.pipeline_mode<synchronous>, transform_indices = @transform_2, window_bounds = array<i64: 1, 128>}, {pipeline_mode = #tpu.pipeline_mode<synchronous>, transform_indices = @transform_3, window_bounds = array<i64: 128, 128>}, {pipeline_mode = #tpu.pipeline_mode<synchronous>, transform_indices = @transform_4, window_bounds = array<i64: 1, 128>}, {transform_indices = @transform_5, window_bounds = array<i64: 256, 1>}, {transform_indices = @transform_6, window_bounds = array<i64: 256, 128>}]} {
    %c0 = arith.constant 0 : index
    %c0_0 = arith.constant 0 : index
    %0 = vector.load %arg1[%c0, %c0_0] : memref<256x96xbf16, #tpu.memory_space<vmem>>, vector<256x96xbf16>
    %c0_1 = arith.constant 0 : index
    %c0_2 = arith.constant 0 : index
    %1 = vector.load %arg2[%c0_1, %c0_2] : memref<96x128xbf16, #tpu.memory_space<vmem>>, vector<96x128xbf16>
    %cst = arith.constant dense<0.000000e+00> : vector<256x128xf32>
    %2 = tpu.matmul %0, %1, %cst {dimension_numbers = #tpu.dot_dimension_numbers<[1], [0], [0], [1], [0, 0, 1, 1], [], []>} : vector<256x96xbf16>, vector<96x128xbf16>, vector<256x128xf32> -> vector<256x128xf32>
    %c0_3 = arith.constant 0 : index
    %c0_4 = arith.constant 0 : index
    %3 = vector.load %arg3[%c0_3, %c0_4] : memref<1x128xf32, #tpu.memory_space<vmem>>, vector<1x128xf32>
    %4 = vector.broadcast %3 : vector<1x128xf32> to vector<256x128xf32>
    %5 = arith.addf %2, %4 : vector<256x128xf32>
    %cst_5 = arith.constant 0.000000e+00 : f32
    %6 = vector.broadcast %cst_5 : f32 to vector<256x128xf32>
    %7 = arith.maximumf %5, %6 : vector<256x128xf32>
    %8 = arith.truncf %7 : vector<256x128xf32> to vector<256x128xbf16>
    %c0_6 = arith.constant 0 : index
    %c0_7 = arith.constant 0 : index
    %9 = vector.load %arg4[%c0_6, %c0_7] : memref<128x128xbf16, #tpu.memory_space<vmem>>, vector<128x128xbf16>
    %cst_8 = arith.constant dense<0.000000e+00> : vector<256x128xf32>
    %10 = tpu.matmul %8, %9, %cst_8 {dimension_numbers = #tpu.dot_dimension_numbers<[1], [0], [0], [1], [0, 0, 1, 1], [], []>} : vector<256x128xbf16>, vector<128x128xbf16>, vector<256x128xf32> -> vector<256x128xf32>
    %c0_9 = arith.constant 0 : index
    %c0_10 = arith.constant 0 : index
    %11 = vector.load %arg5[%c0_9, %c0_10] : memref<1x128xf32, #tpu.memory_space<vmem>>, vector<1x128xf32>
    %12 = vector.broadcast %11 : vector<1x128xf32> to vector<256x128xf32>
    %13 = arith.addf %10, %12 : vector<256x128xf32>
    %14 = tpu.iota {dimensions = array<i32: 1>} : vector<256x128xi32>
    %c0_11 = arith.constant 0 : index
    %c0_12 = arith.constant 0 : index
    %15 = vector.load %arg6[%c0_11, %c0_12] : memref<256x1xi32, #tpu.memory_space<vmem>>, vector<256x1xi32>
    %c31_i32 = arith.constant 31 : i32
    %16 = vector.broadcast %c31_i32 : i32 to vector<256x128xi32>
    %17 = arith.minsi %14, %16 : vector<256x128xi32>
    %18 = vector.broadcast %15 : vector<256x1xi32> to vector<256x128xi32>
    %19 = arith.shrsi %18, %17 : vector<256x128xi32>
    %c1_i32 = arith.constant 1 : i32
    %20 = vector.broadcast %c1_i32 : i32 to vector<256x128xi32>
    %21 = arith.andi %19, %20 : vector<256x128xi32>
    %c0_i32 = arith.constant 0 : i32
    %22 = vector.broadcast %c0_i32 : i32 to vector<256x128xi32>
    %23 = arith.cmpi ne, %21, %22 : vector<256x128xi32>
    %c8_i32 = arith.constant 8 : i32
    %24 = vector.broadcast %c8_i32 : i32 to vector<256x128xi32>
    %25 = arith.cmpi sge, %14, %24 : vector<256x128xi32>
    %26 = arith.ori %23, %25 : vector<256x128xi1>
    %cst_13 = arith.constant 0xFF800000 : f32
    %27 = vector.broadcast %cst_13 : f32 to vector<256x128xf32>
    %28 = arith.select %26, %27, %13 : vector<256x128xi1>, vector<256x128xf32>
    %cst_14 = arith.constant dense<0xFF800000> : vector<256xf32>
    %29 = vector.multi_reduction <maximumf>, %28, %cst_14 [1] : vector<256x128xf32> to vector<256xf32>
    %30 = vector.shape_cast %29 : vector<256xf32> to vector<256x1xf32>
    %31 = vector.broadcast %30 : vector<256x1xf32> to vector<256x128xf32>
    %32 = arith.subf %28, %31 : vector<256x128xf32>
    %33 = math.exp %32 : vector<256x128xf32>
    %cst_15 = arith.constant dense<0.000000e+00> : vector<256xf32>
    %34 = vector.multi_reduction <add>, %33, %cst_15 [1] : vector<256x128xf32> to vector<256xf32>
    %35 = vector.shape_cast %34 : vector<256xf32> to vector<256x1xf32>
    %36 = math.log %35 : vector<256x1xf32>
    %37 = arith.addf %36, %30 : vector<256x1xf32>
    %38 = vector.broadcast %37 : vector<256x1xf32> to vector<256x128xf32>
    %39 = arith.subf %28, %38 : vector<256x128xf32>
    %c0_16 = arith.constant 0 : index
    %c0_17 = arith.constant 0 : index
    %40 = vector.load %arg7[%c0_16, %c0_17] : memref<256x128xf32, #tpu.memory_space<vmem>>, vector<256x128xf32>
    tpu.vector_store %arg7[%c0_16, %c0_17], %39 {strides = array<i32>} : memref<256x128xf32, #tpu.memory_space<vmem>>, vector<256x128xf32>,
    return
  }
  func.func @transform_0(%arg0: i32) -> (i32, i32) {
    %c0_i32 = arith.constant 0 : i32
    %c0_i32_0 = arith.constant 0 : i32
    return %arg0, %c0_i32 : i32, i32
  }
  func.func @transform_1(%arg0: i32) -> (i32, i32) {
    %c0_i32 = arith.constant 0 : i32
    %c0_i32_0 = arith.constant 0 : i32
    %c0_i32_1 = arith.constant 0 : i32
    return %c0_i32, %c0_i32_0 : i32, i32
  }
  func.func @transform_2(%arg0: i32) -> (i32, i32) {
    %c0_i32 = arith.constant 0 : i32
    %c0_i32_0 = arith.constant 0 : i32
    %c0_i32_1 = arith.constant 0 : i32
    return %c0_i32, %c0_i32_0 : i32, i32
  }
  func.func @transform_3(%arg0: i32) -> (i32, i32) {
    %c0_i32 = arith.constant 0 : i32
    %c0_i32_0 = arith.constant 0 : i32
    %c0_i32_1 = arith.constant 0 : i32
    return %c0_i32, %c0_i32_0 : i32, i32
  }
  func.func @transform_4(%arg0: i32) -> (i32, i32) {
    %c0_i32 = arith.constant 0 : i32
    %c0_i32_0 = arith.constant 0 : i32
    %c0_i32_1 = arith.constant 0 : i32
    return %c0_i32, %c0_i32_0 : i32, i32
  }
  func.func @transform_5(%arg0: i32) -> (i32, i32) {
    %c0_i32 = arith.constant 0 : i32
    %c0_i32_0 = arith.constant 0 : i32
    return %arg0, %c0_i32 : i32, i32
  }
  func.func @transform_6(%arg0: i32) -> (i32, i32) {
    %c0_i32 = arith.constant 0 : i32
    %c0_i32_0 = arith.constant 0 : i32
    return %arg0, %c0_i32 : i32, i32
  }
}

</mosaic_0001>

<llo_original>
// kernel: tpu_custom_call.1
$region0: #{tpu_custom_call.1}
  #allocation0 [shape = 'u32[]', space=smem, size = 0x4, offset = 0x4, fixed_abs, tag = 'smem constant byte address 0x4 - core index']
  #allocation1 [shape = 'u32[144,128]{1,0:T(1,128)}', space=vmem, size = 0x12000, scoped, tag = 'internal scratch']
  %s0 = inlined_call_operand.vmem [shape: bf16[256,96], index: 0, kind: input, shape index: {}]
  %s1 = inlined_call_operand.vmem [shape: bf16[96,128], index: 1, kind: input, shape index: {}]
  %s2 = inlined_call_operand.vmem [shape: f32[1,128], index: 2, kind: input, shape index: {}]
  %s3 = inlined_call_operand.vmem [shape: bf16[128,128], index: 3, kind: input, shape index: {}]
  %s4 = inlined_call_operand.vmem [shape: f32[1,128], index: 4, kind: input, shape index: {}]
  %s5 = inlined_call_operand.vmem [shape: s32[256,1], index: 5, kind: input, shape index: {}]
  %s6 = inlined_call_operand.hbm [shape: f32[256,128], index: 6, kind: output, shape index: {}]
  %s7 = sld [smem:[#allocation0]]
  $region34: #{tpu_custom_call.1} parent=0
    _
  %s9 = ssub.s32 1, %s7
  %s10 = scalar_select 0, %s9, %s7
  $region1: #{tpu_custom_call.1} parent=0
    #allocation2 [shape = 'u8[131072]{0}', space=vmem, size = 0x20000, scoped, tag = 'output window, operand 0, single buffered']
    #allocation3 [shape = 's32[1]{0}', space=sflag, size = 0x4, scoped, tag = 'scoped memory for tpu_custom_call.1']
    %11 = vsyncpa [#allocation3], 0
    // Predicated region
    $region2: #{tpu_custom_call.1} parent=1 // pred_check
      _
    $region3: #{tpu_custom_call.1} parent=1 // pred_check_branch
      %13 = sbr.rel (0) target = $region5
    $region4: #{tpu_custom_call.1} parent=1 // pred_region
      _
    $region5: #{tpu_custom_call.1} parent=1 // pred_fallthru
      _
    // Predicated region
    $region6: #{tpu_custom_call.1} parent=1 // pred_check
      _
    $region7: #{tpu_custom_call.1} parent=1 // pred_check_branch
      %15 = sbr.rel (0) target = $region9
    $region8: #{tpu_custom_call.1} parent=1 // pred_region
      _
    $region9: #{tpu_custom_call.1} parent=1 // pred_fallthru
      _
    // Predicated region
    $region10: #{tpu_custom_call.1} parent=1 // pred_check
      _
    $region11: #{tpu_custom_call.1} parent=1 // pred_check_branch
      %17 = sbr.rel (0) target = $region13
    $region12: #{tpu_custom_call.1} parent=1 // pred_region
      _
    $region13: #{tpu_custom_call.1} parent=1 // pred_fallthru
      _
    // Predicated region
    $region14: #{tpu_custom_call.1} parent=1 // pred_check
      _
    $region15: #{tpu_custom_call.1} parent=1 // pred_check_branch
      %19 = sbr.rel (0) target = $region17
    $region16: #{tpu_custom_call.1} parent=1 // pred_region
      _
    $region17: #{tpu_custom_call.1} parent=1 // pred_fallthru
      _
    // Predicated region
    $region18: #{tpu_custom_call.1} parent=1 // pred_check
      _
    $region19: #{tpu_custom_call.1} parent=1 // pred_check_branch
      %21 = sbr.rel (0) target = $region21
    $region20: #{tpu_custom_call.1} parent=1 // pred_region
      _
    $region21: #{tpu_custom_call.1} parent=1 // pred_fallthru
      _
    // Predicated region
    $region22: #{tpu_custom_call.1} parent=1 // pred_check
      _
    $region23: #{tpu_custom_call.1} parent=1 // pred_check_branch
      %23 = sbr.rel (0) target = $region25
    $region24: #{tpu_custom_call.1} parent=1 // pred_region
      _
    $region25: #{tpu_custom_call.1} parent=1 // pred_fallthru
      _
    %v25 = vld [vmem:[%s0] sm:$0xf]
    %v26 = vld [vmem:[%s0 + $0x4] sm:$0xf]
    %v27 = vld [vmem:[%s0 + $0x8] sm:$0xf]
    %v28 = vld [vmem:[%s0 + $0xc] sm:$0xf]
    %v29 = vld [vmem:[%s0 + $0x10] sm:$0xf]
    %v30 = vld [vmem:[%s0 + $0x14] sm:$0xf]
    %v31 = vld [vmem:[%s0 + $0x18] sm:$0xf]
    %v32 = vld [vmem:[%s0 + $0x1c] sm:$0xf]
    %v33 = vld [vmem:[%s0 + $0x20] sm:$0xf]
    %v34 = vld [vmem:[%s0 + $0x24] sm:$0xf]
    %v35 = vld [vmem:[%s0 + $0x28] sm:$0xf]
    %v36 = vld [vmem:[%s0 + $0x2c] sm:$0xf]
    %v37 = vld [vmem:[%s0 + $0x30] sm:$0xf]
    %v38 = vld [vmem:[%s0 + $0x34] sm:$0xf]
    %v39 = vld [vmem:[%s0 + $0x38] sm:$0xf]
    %v40 = vld [vmem:[%s0 + $0x3c] sm:$0xf]
    %v41 = vld [vmem:[%s0 + $0x40] sm:$0xf]
    %v42 = vld [vmem:[%s0 + $0x44] sm:$0xf]
    %v43 = vld [vmem:[%s0 + $0x48] sm:$0xf]
    %v44 = vld [vmem:[%s0 + $0x4c] sm:$0xf]
    %v45 = vld [vmem:[%s0 + $0x50] sm:$0xf]
    %v46 = vld [vmem:[%s0 + $0x54] sm:$0xf]
    %v47 = vld [vmem:[%s0 + $0x58] sm:$0xf]
    %v48 = vld [vmem:[%s0 + $0x5c] sm:$0xf]
    %v49 = vld [vmem:[%s0 + $0x60] sm:$0xf]
    %v50 = vld [vmem:[%s0 + $0x64] sm:$0xf]
    %v51 = vld [vmem:[%s0 + $0x68] sm:$0xf]
    %v52 = vld [vmem:[%s0 + $0x6c] sm:$0xf]
    %v53 = vld [vmem:[%s0 + $0x70] sm:$0xf]
    %v54 = vld [vmem:[%s0 + $0x74] sm:$0xf]
    %v55 = vld [vmem:[%s0 + $0x78] sm:$0xf]
    %v56 = vld [vmem:[%s0 + $0x7c] sm:$0xf]
    %v57 = vld [vmem:[%s1] sm:$0xf]
    %v58 = vld [vmem:[%s1 + $0x4] sm:$0xf]
    %v59 = vld [vmem:[%s1 + $0x8] sm:$0xf]
    %v60 = vld [vmem:[%s1 + $0xc] sm:$0xf]
    %v61 = vld [vmem:[%s1 + $0x10] sm:$0xf]
    %v62 = vld [vmem:[%s1 + $0x14] sm:$0xf]
    %v63 = vld [vmem:[%s1 + $0x18] sm:$0xf]
    %v64 = vld [vmem:[%s1 + $0x1c] sm:$0xf]
    %v65 = vld [vmem:[%s1 + $0x20] sm:$0xf]
    %v66 = vld [vmem:[%s1 + $0x24] sm:$0xf]
    %v67 = vld [vmem:[%s1 + $0x28] sm:$0xf]
    %v68 = vld [vmem:[%s1 + $0x2c] sm:$0xf]
    %v69 = vld [vmem:[%s2] sm:$0x1]
    %v71 = vlaneseq
    %v72 = vshrl.u32 %v71, 7
    %v73 = vsub.s32 0, %v72
    %v74 = vrot.slane %v69, %v73
    %v108 = vunpack.c.l.b16 %v25
    %v109 = vunpack.c.l.b16 %v26
    %v110 = vunpack.c.l.b16 %v27
    %v111 = vunpack.c.l.b16 %v28
    %v112 = vunpack.c.l.b16 %v29
    %v113 = vunpack.c.l.b16 %v30
    %v114 = vunpack.c.l.b16 %v31
    %v115 = vunpack.c.l.b16 %v32
    %v116 = vunpack.c.l.b16 %v33
    %v117 = vunpack.c.l.b16 %v34
    %v118 = vunpack.c.l.b16 %v35
    %v119 = vunpack.c.l.b16 %v36
    %v120 = vunpack.c.l.b16 %v37
    %v121 = vunpack.c.l.b16 %v38
    %v122 = vunpack.c.l.b16 %v39
    %v123 = vunpack.c.l.b16 %v40
    %v124 = vunpack.c.l.b16 %v41
    %v125 = vunpack.c.l.b16 %v42
    %v126 = vunpack.c.l.b16 %v43
    %v127 = vunpack.c.l.b16 %v44
    %v128 = vunpack.c.l.b16 %v45
    %v129 = vunpack.c.l.b16 %v46
    %v130 = vunpack.c.l.b16 %v47
    %v131 = vunpack.c.l.b16 %v48
    %v132 = vunpack.c.l.b16 %v49
    %v133 = vunpack.c.l.b16 %v50
    %v134 = vunpack.c.l.b16 %v51
    %v135 = vunpack.c.l.b16 %v52
    %v136 = vunpack.c.l.b16 %v53
    %v137 = vunpack.c.l.b16 %v54
    %v138 = vunpack.c.l.b16 %v55
    %v139 = vunpack.c.l.b16 %v56
    %v140 = vpack.c.b16 %v109, %v108
    %v141 = vpack.c.b16 %v111, %v110
    %v142 = vpack.c.b16 %v113, %v112
    %v143 = vpack.c.b16 %v115, %v114
    %v144 = vpack.c.b16 %v117, %v116
    %v145 = vpack.c.b16 %v119, %v118
    %v146 = vpack.c.b16 %v121, %v120
    %v147 = vpack.c.b16 %v123, %v122
    %v148 = vpack.c.b16 %v125, %v124
    %v149 = vpack.c.b16 %v127, %v126
    %v150 = vpack.c.b16 %v129, %v128
    %v151 = vpack.c.b16 %v131, %v130
    %v152 = vpack.c.b16 %v133, %v132
    %v153 = vpack.c.b16 %v135, %v134
    %v154 = vpack.c.b16 %v137, %v136
    %v155 = vpack.c.b16 %v139, %v138
    %v168 = vunpack.c.l.b16 %v57
    %v169 = vunpack.c.l.b16 %v58
    %v170 = vunpack.c.l.b16 %v59
    %v171 = vunpack.c.l.b16 %v60
    %v172 = vunpack.c.l.b16 %v61
    %v173 = vunpack.c.l.b16 %v62
    %v174 = vunpack.c.l.b16 %v63
    %v175 = vunpack.c.l.b16 %v64
    %v176 = vunpack.c.l.b16 %v65
    %v177 = vunpack.c.l.b16 %v66
    %v178 = vunpack.c.l.b16 %v67
    %v179 = vunpack.c.l.b16 %v68
    %v180 = vpack.c.b16 %v169, %v168
    %v181 = vpack.c.b16 %v171, %v170
    %v182 = vpack.c.b16 %v173, %v172
    %v183 = vpack.c.b16 %v175, %v174
    %v184 = vpack.c.b16 %v177, %v176
    %v185 = vpack.c.b16 %v179, %v178
    %vm192 = vcmask 785408
    %v194 = vsel %vm192, %v140, 0
    %v197 = vsel %vm192, %v141, 0
    %v200 = vsel %vm192, %v142, 0
    %v203 = vsel %vm192, %v143, 0
    %v206 = vsel %vm192, %v144, 0
    %v209 = vsel %vm192, %v145, 0
    %v212 = vsel %vm192, %v146, 0
    %v215 = vsel %vm192, %v147, 0
    %v218 = vsel %vm192, %v148, 0
    %v221 = vsel %vm192, %v149, 0
    %v224 = vsel %vm192, %v150, 0
    %v227 = vsel %vm192, %v151, 0
    %v230 = vsel %vm192, %v152, 0
    %v233 = vsel %vm192, %v153, 0
    %v236 = vsel %vm192, %v154, 0
    %v239 = vsel %vm192, %v155, 0
    %241 = vmatprep.subr.bf16.mxu0 0
    %242 = vmatpush1.bf16.msra.mxu0 0
    %243 = vmatprep.subr.bf16.mxu0 0
    %244 = vmatpush1.bf16.msra.mxu0 0
    %245 = vmatprep.subr.bf16.mxu0 0
    %246 = vmatpush1.bf16.msra.mxu0 %v185
    %247 = vmatprep.subr.bf16.mxu0 0
    %248 = vmatpush1.bf16.msra.mxu0 %v184
    %249 = vmatprep.subr.bf16.mxu0 0
    %250 = vmatpush1.bf16.msra.mxu0 %v183
    %251 = vmatprep.subr.bf16.mxu0 0
    %252 = vmatpush1.bf16.msra.mxu0 %v182
    %253 = vmatprep.subr.bf16.mxu0 0
    %254 = vmatpush1.bf16.msra.mxu0 %v181
    %255 = vmatprep.subr.bf16.mxu0 0
    %256 = vmatpush1.bf16.msra.mxu0 %v180
    %257 = vmatprep.subr.bf16.mxu0 0
    %258 = vmatpush2.bf16.msra.mxu0 0
    %259 = vmatprep.subr.bf16.mxu0 0
    %260 = vmatpush2.bf16.msra.mxu0 0
    %261 = vmatprep.subr.bf16.mxu0 0
    %262 = vmatpush2.bf16.msra.mxu0 0
    %263 = vmatprep.subr.bf16.mxu0 0
    %264 = vmatpush2.bf16.msra.mxu0 0
    %265 = vmatprep.subr.bf16.mxu0 0
    %266 = vmatpush2.bf16.msra.mxu0 0
    %267 = vmatprep.subr.bf16.mxu0 0
    %268 = vmatpush2.bf16.msra.mxu0 0
    %269 = vmatprep.subr.bf16.mxu0 0
    %270 = vmatpush2.bf16.msra.mxu0 0
    %271 = vmatprep.subr.bf16.mxu0 0
    %272 = vmatpush2.bf16.msra.mxu0 0
    %273 = vmatprep.mubr.bf16.mxu0 0
    %274 = vmatmul.mubr.bf16.gmra.mxu0 %v194
    %v275 = vpop.f32.mrf.mxu0
    %v276 = vadd.f32 %v74, %v275
    %v277 = vpop.f32.mrf.mxu0
    %v278 = vpop.f32.mrf.mxu0
    %v279 = vadd.f32 %v74, %v278
    %v280 = vpop.f32.mrf.mxu0
    %281 = vmatprep.mubr.bf16.mxu0 0
    %282 = vmatmul.mubr.bf16.gmra.mxu0 %v197
    %v283 = vpop.f32.mrf.mxu0
    %v284 = vadd.f32 %v74, %v283
    %v285 = vpop.f32.mrf.mxu0
    %v286 = vpop.f32.mrf.mxu0
    %v287 = vadd.f32 %v74, %v286
    %v288 = vpop.f32.mrf.mxu0
    %289 = vmatprep.mubr.bf16.mxu0 0
    %290 = vmatmul.mubr.bf16.gmra.mxu0 %v200
    %v291 = vpop.f32.mrf.mxu0
    %v292 = vadd.f32 %v74, %v291
    %v293 = vpop.f32.mrf.mxu0
    %v294 = vpop.f32.mrf.mxu0
    %v295 = vadd.f32 %v74, %v294
    %v296 = vpop.f32.mrf.mxu0
    %297 = vmatprep.mubr.bf16.mxu0 0
    %298 = vmatmul.mubr.bf16.gmra.mxu0 %v203
    %v299 = vpop.f32.mrf.mxu0
    %v300 = vadd.f32 %v74, %v299
    %v301 = vpop.f32.mrf.mxu0
    %v302 = vpop.f32.mrf.mxu0
    %v303 = vadd.f32 %v74, %v302
    %v304 = vpop.f32.mrf.mxu0
    %305 = vmatprep.mubr.bf16.mxu0 0
    %306 = vmatmul.mubr.bf16.gmra.mxu0 %v206
    %v307 = vpop.f32.mrf.mxu0
    %v308 = vadd.f32 %v74, %v307
    %v309 = vpop.f32.mrf.mxu0
    %v310 = vpop.f32.mrf.mxu0
    %v311 = vadd.f32 %v74, %v310
    %v312 = vpop.f32.mrf.mxu0
    %313 = vmatprep.mubr.bf16.mxu0 0
    %314 = vmatmul.mubr.bf16.gmra.mxu0 %v209
    %v315 = vpop.f32.mrf.mxu0
    %v316 = vadd.f32 %v74, %v315
    %v317 = vpop.f32.mrf.mxu0
    %v318 = vpop.f32.mrf.mxu0
    %v319 = vadd.f32 %v74, %v318
    %v320 = vpop.f32.mrf.mxu0
    %321 = vmatprep.mubr.bf16.mxu0 0
    %322 = vmatmul.mubr.bf16.gmra.mxu0 %v212
    %v323 = vpop.f32.mrf.mxu0
    %v324 = vadd.f32 %v74, %v323
    %v325 = vpop.f32.mrf.mxu0
    %v326 = vpop.f32.mrf.mxu0
    %v327 = vadd.f32 %v74, %v326
    %v328 = vpop.f32.mrf.mxu0
    %329 = vmatprep.mubr.bf16.mxu0 0
    %330 = vmatmul.mubr.bf16.gmra.mxu0 %v215
    %v331 = vpop.f32.mrf.mxu0
    %v332 = vadd.f32 %v74, %v331
    %v333 = vpop.f32.mrf.mxu0
    %v334 = vpop.f32.mrf.mxu0
    %v335 = vadd.f32 %v74, %v334
    %v336 = vpop.f32.mrf.mxu0
    %337 = vmatprep.mubr.bf16.mxu0 0
    %338 = vmatmul.mubr.bf16.gmra.mxu0 %v218
    %v339 = vpop.f32.mrf.mxu0
    %v340 = vadd.f32 %v74, %v339
    %v341 = vpop.f32.mrf.mxu0
    %v342 = vpop.f32.mrf.mxu0
    %v343 = vadd.f32 %v74, %v342
    %v344 = vpop.f32.mrf.mxu0
    %345 = vmatprep.mubr.bf16.mxu0 0
    %346 = vmatmul.mubr.bf16.gmra.mxu0 %v221
    %v347 = vpop.f32.mrf.mxu0
    %v348 = vadd.f32 %v74, %v347
    %v349 = vpop.f32.mrf.mxu0
    %v350 = vpop.f32.mrf.mxu0
    %v351 = vadd.f32 %v74, %v350
    %v352 = vpop.f32.mrf.mxu0
    %353 = vmatprep.mubr.bf16.mxu0 0
    %354 = vmatmul.mubr.bf16.gmra.mxu0 %v224
    %v355 = vpop.f32.mrf.mxu0
    %v356 = vadd.f32 %v74, %v355
    %v357 = vpop.f32.mrf.mxu0
    %v358 = vpop.f32.mrf.mxu0
    %v359 = vadd.f32 %v74, %v358
    %v360 = vpop.f32.mrf.mxu0
    %361 = vmatprep.mubr.bf16.mxu0 0
    %362 = vmatmul.mubr.bf16.gmra.mxu0 %v227
    %v363 = vpop.f32.mrf.mxu0
    %v364 = vadd.f32 %v74, %v363
    %v365 = vpop.f32.mrf.mxu0
    %v366 = vpop.f32.mrf.mxu0
    %v367 = vadd.f32 %v74, %v366
    %v368 = vpop.f32.mrf.mxu0
    %369 = vmatprep.mubr.bf16.mxu0 0
    %370 = vmatmul.mubr.bf16.gmra.mxu0 %v230
    %v371 = vpop.f32.mrf.mxu0
    %v372 = vadd.f32 %v74, %v371
    %v373 = vpop.f32.mrf.mxu0
    %v374 = vpop.f32.mrf.mxu0
    %v375 = vadd.f32 %v74, %v374
    %v376 = vpop.f32.mrf.mxu0
    %377 = vmatprep.mubr.bf16.mxu0 0
    %378 = vmatmul.mubr.bf16.gmra.mxu0 %v233
    %v379 = vpop.f32.mrf.mxu0
    %v380 = vadd.f32 %v74, %v379
    %v381 = vpop.f32.mrf.mxu0
    %v382 = vpop.f32.mrf.mxu0
    %v383 = vadd.f32 %v74, %v382
    %v384 = vpop.f32.mrf.mxu0
    %385 = vmatprep.mubr.bf16.mxu0 0
    %386 = vmatmul.mubr.bf16.gmra.mxu0 %v236
    %v387 = vpop.f32.mrf.mxu0
    %v388 = vadd.f32 %v74, %v387
    %v389 = vpop.f32.mrf.mxu0
    %v390 = vpop.f32.mrf.mxu0
    %v391 = vadd.f32 %v74, %v390
    %v392 = vpop.f32.mrf.mxu0
    %393 = vmatprep.mubr.bf16.mxu0 0
    %394 = vmatmul.mubr.bf16.gmra.mxu0 %v239
    %v395 = vpop.f32.mrf.mxu0
    %v396 = vadd.f32 %v74, %v395
    %v397 = vpop.f32.mrf.mxu0
    %v398 = vpop.f32.mrf.mxu0
    %v399 = vadd.f32 %v74, %v398
    %v400 = vpop.f32.mrf.mxu0
    %401 = vdwg.mxu0
    %v402 = vmax.f32 %v276, 0.0
    %v403 = vmax.f32 %v279, 0.0
    %v404 = vmax.f32 %v284, 0.0
    %v405 = vmax.f32 %v287, 0.0
    %v406 = vmax.f32 %v292, 0.0
    %v407 = vmax.f32 %v295, 0.0
    %v408 = vmax.f32 %v300, 0.0
    %v409 = vmax.f32 %v303, 0.0
    %v410 = vmax.f32 %v308, 0.0
    %v411 = vmax.f32 %v311, 0.0
    %v412 = vmax.f32 %v316, 0.0
    %v413 = vmax.f32 %v319, 0.0
    %v414 = vmax.f32 %v324, 0.0
    %v415 = vmax.f32 %v327, 0.0
    %v416 = vmax.f32 %v332, 0.0
    %v417 = vmax.f32 %v335, 0.0
    %v418 = vmax.f32 %v340, 0.0
    %v419 = vmax.f32 %v343, 0.0
    %v420 = vmax.f32 %v348, 0.0
    %v421 = vmax.f32 %v351, 0.0
    %v422 = vmax.f32 %v356, 0.0
    %v423 = vmax.f32 %v359, 0.0
    %v424 = vmax.f32 %v364, 0.0
    %v425 = vmax.f32 %v367, 0.0
    %v426 = vmax.f32 %v372, 0.0
    %v427 = vmax.f32 %v375, 0.0
    %v428 = vmax.f32 %v380, 0.0
    %v429 = vmax.f32 %v383, 0.0
    %v430 = vmax.f32 %v388, 0.0
    %v431 = vmax.f32 %v391, 0.0
    %v432 = vmax.f32 %v396, 0.0
    %v433 = vmax.f32 %v399, 0.0
    %v434 = vpack.c.bf16 %v403, %v402
    %v435 = vpack.c.bf16 %v405, %v404
    %v436 = vpack.c.bf16 %v407, %v406
    %v437 = vpack.c.bf16 %v409, %v408
    %v438 = vpack.c.bf16 %v411, %v410
    %v439 = vpack.c.bf16 %v413, %v412
    %v440 = vpack.c.bf16 %v415, %v414
    %v441 = vpack.c.bf16 %v417, %v416
    %v442 = vpack.c.bf16 %v419, %v418
    %v443 = vpack.c.bf16 %v421, %v420
    %v444 = vpack.c.bf16 %v423, %v422
    %v445 = vpack.c.bf16 %v425, %v424
    %v446 = vpack.c.bf16 %v427, %v426
    %v447 = vpack.c.bf16 %v429, %v428
    %v448 = vpack.c.bf16 %v431, %v430
    %v449 = vpack.c.bf16 %v433, %v432
    %v450 = vld [vmem:[%s3] sm:$0xf]
    %v451 = vld [vmem:[%s3 + $0x4] sm:$0xf]
    %v452 = vld [vmem:[%s3 + $0x8] sm:$0xf]
    %v453 = vld [vmem:[%s3 + $0xc] sm:$0xf]
    %v454 = vld [vmem:[%s3 + $0x10] sm:$0xf]
    %v455 = vld [vmem:[%s3 + $0x14] sm:$0xf]
    %v456 = vld [vmem:[%s3 + $0x18] sm:$0xf]
    %v457 = vld [vmem:[%s3 + $0x1c] sm:$0xf]
    %v458 = vld [vmem:[%s3 + $0x20] sm:$0xf]
    %v459 = vld [vmem:[%s3 + $0x24] sm:$0xf]
    %v460 = vld [vmem:[%s3 + $0x28] sm:$0xf]
    %v461 = vld [vmem:[%s3 + $0x2c] sm:$0xf]
    %v462 = vld [vmem:[%s3 + $0x30] sm:$0xf]
    %v463 = vld [vmem:[%s3 + $0x34] sm:$0xf]
    %v464 = vld [vmem:[%s3 + $0x38] sm:$0xf]
    %v465 = vld [vmem:[%s3 + $0x3c] sm:$0xf]
    %v466 = vld [vmem:[%s4] sm:$0x1]
    %v468 = vlaneseq
    %v469 = vshrl.u32 %v468, 7
    %v470 = vsub.s32 0, %v469
    %v471 = vrot.slane %v466, %v470
    %v489 = vunpack.c.l.b16 %v450
    %v490 = vunpack.c.l.b16 %v451
    %v491 = vunpack.c.l.b16 %v452
    %v492 = vunpack.c.l.b16 %v453
    %v493 = vunpack.c.l.b16 %v454
    %v494 = vunpack.c.l.b16 %v455
    %v495 = vunpack.c.l.b16 %v456
    %v496 = vunpack.c.l.b16 %v457
    %v497 = vunpack.c.l.b16 %v458
    %v498 = vunpack.c.l.b16 %v459
    %v499 = vunpack.c.l.b16 %v460
    %v500 = vunpack.c.l.b16 %v461
    %v501 = vunpack.c.l.b16 %v462
    %v502 = vunpack.c.l.b16 %v463
    %v503 = vunpack.c.l.b16 %v464
    %v504 = vunpack.c.l.b16 %v465
    %v505 = vpack.c.b16 %v490, %v489
    %v506 = vpack.c.b16 %v492, %v491
    %v507 = vpack.c.b16 %v494, %v493
    %v508 = vpack.c.b16 %v496, %v495
    %v509 = vpack.c.b16 %v498, %v497
    %v510 = vpack.c.b16 %v500, %v499
    %v511 = vpack.c.b16 %v502, %v501
    %v512 = vpack.c.b16 %v504, %v503
    %521 = vmatprep.subr.bf16.mxu0 0
    %522 = vmatpush1.bf16.msra.mxu0 %v512
    %523 = vmatprep.subr.bf16.mxu0 0
    %524 = vmatpush1.bf16.msra.mxu0 %v511
    %525 = vmatprep.subr.bf16.mxu0 0
    %526 = vmatpush1.bf16.msra.mxu0 %v510
    %527 = vmatprep.subr.bf16.mxu0 0
    %528 = vmatpush1.bf16.msra.mxu0 %v509
    %529 = vmatprep.subr.bf16.mxu0 0
    %530 = vmatpush1.bf16.msra.mxu0 %v508
    %531 = vmatprep.subr.bf16.mxu0 0
    %532 = vmatpush1.bf16.msra.mxu0 %v507
    %533 = vmatprep.subr.bf16.mxu0 0
    %534 = vmatpush1.bf16.msra.mxu0 %v506
    %535 = vmatprep.subr.bf16.mxu0 0
    %536 = vmatpush1.bf16.msra.mxu0 %v505
    %537 = vmatprep.subr.bf16.mxu0 0
    %538 = vmatpush2.bf16.msra.mxu0 0
    %539 = vmatprep.subr.bf16.mxu0 0
    %540 = vmatpush2.bf16.msra.mxu0 0
    %541 = vmatprep.subr.bf16.mxu0 0
    %542 = vmatpush2.bf16.msra.mxu0 0
    %543 = vmatprep.subr.bf16.mxu0 0
    %544 = vmatpush2.bf16.msra.mxu0 0
    %545 = vmatprep.subr.bf16.mxu0 0
    %546 = vmatpush2.bf16.msra.mxu0 0
    %547 = vmatprep.subr.bf16.mxu0 0
    %548 = vmatpush2.bf16.msra.mxu0 0
    %549 = vmatprep.subr.bf16.mxu0 0
    %550 = vmatpush2.bf16.msra.mxu0 0
    %551 = vmatprep.subr.bf16.mxu0 0
    %552 = vmatpush2.bf16.msra.mxu0 0
    %553 = vmatprep.mubr.bf16.mxu0 0
    %554 = vmatmul.mubr.bf16.gmra.mxu0 %v434
    %v555 = vpop.f32.mrf.mxu0
    %v556 = vadd.f32 %v471, %v555
    %v557 = vpop.f32.mrf.mxu0
    %v558 = vpop.f32.mrf.mxu0
    %v559 = vadd.f32 %v471, %v558
    %v560 = vpop.f32.mrf.mxu0
    %561 = vmatprep.mubr.bf16.mxu0 0
    %562 = vmatmul.mubr.bf16.gmra.mxu0 %v435
    %v563 = vpop.f32.mrf.mxu0
    %v564 = vadd.f32 %v471, %v563
    %v565 = vpop.f32.mrf.mxu0
    %v566 = vpop.f32.mrf.mxu0
    %v567 = vadd.f32 %v471, %v566
    %v568 = vpop.f32.mrf.mxu0
    %569 = vmatprep.mubr.bf16.mxu0 0
    %570 = vmatmul.mubr.bf16.gmra.mxu0 %v436
    %v571 = vpop.f32.mrf.mxu0
    %v572 = vadd.f32 %v471, %v571
    %v573 = vpop.f32.mrf.mxu0
    %v574 = vpop.f32.mrf.mxu0
    %v575 = vadd.f32 %v471, %v574
    %v576 = vpop.f32.mrf.mxu0
    %577 = vmatprep.mubr.bf16.mxu0 0
    %578 = vmatmul.mubr.bf16.gmra.mxu0 %v437
    %v579 = vpop.f32.mrf.mxu0
    %v580 = vadd.f32 %v471, %v579
    %v581 = vpop.f32.mrf.mxu0
    %v582 = vpop.f32.mrf.mxu0
    %v583 = vadd.f32 %v471, %v582
    %v584 = vpop.f32.mrf.mxu0
    %585 = vmatprep.mubr.bf16.mxu0 0
    %586 = vmatmul.mubr.bf16.gmra.mxu0 %v438
    %v587 = vpop.f32.mrf.mxu0
    %v588 = vadd.f32 %v471, %v587
    %v589 = vpop.f32.mrf.mxu0
    %v590 = vpop.f32.mrf.mxu0
    %v591 = vadd.f32 %v471, %v590
    %v592 = vpop.f32.mrf.mxu0
    %593 = vmatprep.mubr.bf16.mxu0 0
    %594 = vmatmul.mubr.bf16.gmra.mxu0 %v439
    %v595 = vpop.f32.mrf.mxu0
    %v596 = vadd.f32 %v471, %v595
    %v597 = vpop.f32.mrf.mxu0
    %v598 = vpop.f32.mrf.mxu0
    %v599 = vadd.f32 %v471, %v598
    %v600 = vpop.f32.mrf.mxu0
    %601 = vmatprep.mubr.bf16.mxu0 0
    %602 = vmatmul.mubr.bf16.gmra.mxu0 %v440
    %v603 = vpop.f32.mrf.mxu0
    %v604 = vadd.f32 %v471, %v603
    %v605 = vpop.f32.mrf.mxu0
    %v606 = vpop.f32.mrf.mxu0
    %v607 = vadd.f32 %v471, %v606
    %v608 = vpop.f32.mrf.mxu0
    %609 = vmatprep.mubr.bf16.mxu0 0
    %610 = vmatmul.mubr.bf16.gmra.mxu0 %v441
    %v611 = vpop.f32.mrf.mxu0
    %v612 = vadd.f32 %v471, %v611
    %v613 = vpop.f32.mrf.mxu0
    %v614 = vpop.f32.mrf.mxu0
    %v615 = vadd.f32 %v471, %v614
    %v616 = vpop.f32.mrf.mxu0
    %617 = vmatprep.mubr.bf16.mxu0 0
    %618 = vmatmul.mubr.bf16.gmra.mxu0 %v442
    %v619 = vpop.f32.mrf.mxu0
    %v620 = vadd.f32 %v471, %v619
    %v621 = vpop.f32.mrf.mxu0
    %v622 = vpop.f32.mrf.mxu0
    %v623 = vadd.f32 %v471, %v622
    %v624 = vpop.f32.mrf.mxu0
    %625 = vmatprep.mubr.bf16.mxu0 0
    %626 = vmatmul.mubr.bf16.gmra.mxu0 %v443
    %v627 = vpop.f32.mrf.mxu0
    %v628 = vadd.f32 %v471, %v627
    %v629 = vpop.f32.mrf.mxu0
    %v630 = vpop.f32.mrf.mxu0
    %v631 = vadd.f32 %v471, %v630
    %v632 = vpop.f32.mrf.mxu0
    %633 = vmatprep.mubr.bf16.mxu0 0
    %634 = vmatmul.mubr.bf16.gmra.mxu0 %v444
    %v635 = vpop.f32.mrf.mxu0
    %v636 = vadd.f32 %v471, %v635
    %v637 = vpop.f32.mrf.mxu0
    %v638 = vpop.f32.mrf.mxu0
    %v639 = vadd.f32 %v471, %v638
    %v640 = vpop.f32.mrf.mxu0
    %641 = vmatprep.mubr.bf16.mxu0 0
    %642 = vmatmul.mubr.bf16.gmra.mxu0 %v445
    %v643 = vpop.f32.mrf.mxu0
    %v644 = vadd.f32 %v471, %v643
    %v645 = vpop.f32.mrf.mxu0
    %v646 = vpop.f32.mrf.mxu0
    %v647 = vadd.f32 %v471, %v646
    %v648 = vpop.f32.mrf.mxu0
    %649 = vmatprep.mubr.bf16.mxu0 0
    %650 = vmatmul.mubr.bf16.gmra.mxu0 %v446
    %v651 = vpop.f32.mrf.mxu0
    %v652 = vadd.f32 %v471, %v651
    %v653 = vpop.f32.mrf.mxu0
    %v654 = vpop.f32.mrf.mxu0
    %v655 = vadd.f32 %v471, %v654
    %v656 = vpop.f32.mrf.mxu0
    %657 = vmatprep.mubr.bf16.mxu0 0
    %658 = vmatmul.mubr.bf16.gmra.mxu0 %v447
    %v659 = vpop.f32.mrf.mxu0
    %v660 = vadd.f32 %v471, %v659
    %v661 = vpop.f32.mrf.mxu0
    %v662 = vpop.f32.mrf.mxu0
    %v663 = vadd.f32 %v471, %v662
    %v664 = vpop.f32.mrf.mxu0
    %665 = vmatprep.mubr.bf16.mxu0 0
    %666 = vmatmul.mubr.bf16.gmra.mxu0 %v448
    %v667 = vpop.f32.mrf.mxu0
    %v668 = vadd.f32 %v471, %v667
    %v669 = vpop.f32.mrf.mxu0
    %v670 = vpop.f32.mrf.mxu0
    %v671 = vadd.f32 %v471, %v670
    %v672 = vpop.f32.mrf.mxu0
    %673 = vmatprep.mubr.bf16.mxu0 0
    %674 = vmatmul.mubr.bf16.gmra.mxu0 %v449
    %v675 = vpop.f32.mrf.mxu0
    %v676 = vadd.f32 %v471, %v675
    %v677 = vpop.f32.mrf.mxu0
    %v678 = vpop.f32.mrf.mxu0
    %v679 = vadd.f32 %v471, %v678
    %v680 = vpop.f32.mrf.mxu0
    %681 = vdwg.mxu0
    %v682 = vlaneseq
    %v683 = vand.u32 %v682, 127
    %v684 = vld [vmem:[%s5] sm:$0xff]
    %v685 = vld [vmem:[%s5 + $0x8] sm:$0xff]
    %v686 = vld [vmem:[%s5 + $0x10] sm:$0xff]
    %v687 = vld [vmem:[%s5 + $0x18] sm:$0xff]
    %v688 = vld [vmem:[%s5 + $0x20] sm:$0xff]
    %v689 = vld [vmem:[%s5 + $0x28] sm:$0xff]
    %v690 = vld [vmem:[%s5 + $0x30] sm:$0xff]
    %v691 = vld [vmem:[%s5 + $0x38] sm:$0xff]
    %v692 = vld [vmem:[%s5 + $0x40] sm:$0xff]
    %v693 = vld [vmem:[%s5 + $0x48] sm:$0xff]
    %v694 = vld [vmem:[%s5 + $0x50] sm:$0xff]
    %v695 = vld [vmem:[%s5 + $0x58] sm:$0xff]
    %v696 = vld [vmem:[%s5 + $0x60] sm:$0xff]
    %v697 = vld [vmem:[%s5 + $0x68] sm:$0xff]
    %v698 = vld [vmem:[%s5 + $0x70] sm:$0xff]
    %v699 = vld [vmem:[%s5 + $0x78] sm:$0xff]
    %v700 = vld [vmem:[%s5 + $0x80] sm:$0xff]
    %v701 = vld [vmem:[%s5 + $0x88] sm:$0xff]
    %v702 = vld [vmem:[%s5 + $0x90] sm:$0xff]
    %v703 = vld [vmem:[%s5 + $0x98] sm:$0xff]
    %v704 = vld [vmem:[%s5 + $0xa0] sm:$0xff]
    %v705 = vld [vmem:[%s5 + $0xa8] sm:$0xff]
    %v706 = vld [vmem:[%s5 + $0xb0] sm:$0xff]
    %v707 = vld [vmem:[%s5 + $0xb8] sm:$0xff]
    %v708 = vld [vmem:[%s5 + $0xc0] sm:$0xff]
    %v709 = vld [vmem:[%s5 + $0xc8] sm:$0xff]
    %v710 = vld [vmem:[%s5 + $0xd0] sm:$0xff]
    %v711 = vld [vmem:[%s5 + $0xd8] sm:$0xff]
    %v712 = vld [vmem:[%s5 + $0xe0] sm:$0xff]
    %v713 = vld [vmem:[%s5 + $0xe8] sm:$0xff]
    %v714 = vld [vmem:[%s5 + $0xf0] sm:$0xff]
    %v715 = vld [vmem:[%s5 + $0xf8] sm:$0xff]
    %vm716 = vcmp.lt.s32.totalorder %v683, 31
    %v717 = vsel %vm716, %v683, 31
    %718 = vset.pattern.permute.xlu0 0
    %719 = vperm.xlu0 %718, %v684
    %v720 = vpop.permute.xlu0 %719
    %721 = vset.pattern.permute.xlu0 0
    %722 = vperm.xlu0 %721, %v685
    %v723 = vpop.permute.xlu0 %722
    %724 = vset.pattern.permute.xlu0 0
    %725 = vperm.xlu0 %724, %v686
    %v726 = vpop.permute.xlu0 %725
    %727 = vset.pattern.permute.xlu0 0
    %728 = vperm.xlu0 %727, %v687
    %v729 = vpop.permute.xlu0 %728
    %730 = vset.pattern.permute.xlu0 0
    %731 = vperm.xlu0 %730, %v688
    %v732 = vpop.permute.xlu0 %731
    %733 = vset.pattern.permute.xlu0 0
    %734 = vperm.xlu0 %733, %v689
    %v735 = vpop.permute.xlu0 %734
    %736 = vset.pattern.permute.xlu0 0
    %737 = vperm.xlu0 %736, %v690
    %v738 = vpop.permute.xlu0 %737
    %739 = vset.pattern.permute.xlu0 0
    %740 = vperm.xlu0 %739, %v691
    %v741 = vpop.permute.xlu0 %740
    %742 = vset.pattern.permute.xlu0 0
    %743 = vperm.xlu0 %742, %v692
    %v744 = vpop.permute.xlu0 %743
    %745 = vset.pattern.permute.xlu0 0
    %746 = vperm.xlu0 %745, %v693
    %v747 = vpop.permute.xlu0 %746
    %748 = vset.pattern.permute.xlu0 0
    %749 = vperm.xlu0 %748, %v694
    %v750 = vpop.permute.xlu0 %749
    %751 = vset.pattern.permute.xlu0 0
    %752 = vperm.xlu0 %751, %v695
    %v753 = vpop.permute.xlu0 %752
    %754 = vset.pattern.permute.xlu0 0
    %755 = vperm.xlu0 %754, %v696
    %v756 = vpop.permute.xlu0 %755
    %757 = vset.pattern.permute.xlu0 0
    %758 = vperm.xlu0 %757, %v697
    %v759 = vpop.permute.xlu0 %758
    %760 = vset.pattern.permute.xlu0 0
    %761 = vperm.xlu0 %760, %v698
    %v762 = vpop.permute.xlu0 %761
    %763 = vset.pattern.permute.xlu0 0
    %764 = vperm.xlu0 %763, %v699
    %v765 = vpop.permute.xlu0 %764
    %766 = vset.pattern.permute.xlu0 0
    %767 = vperm.xlu0 %766, %v700
    %v768 = vpop.permute.xlu0 %767
    %769 = vset.pattern.permute.xlu0 0
    %770 = vperm.xlu0 %769, %v701
    %v771 = vpop.permute.xlu0 %770
    %772 = vset.pattern.permute.xlu0 0
    %773 = vperm.xlu0 %772, %v702
    %v774 = vpop.permute.xlu0 %773
    %775 = vset.pattern.permute.xlu0 0
    %776 = vperm.xlu0 %775, %v703
    %v777 = vpop.permute.xlu0 %776
    %778 = vset.pattern.permute.xlu0 0
    %779 = vperm.xlu0 %778, %v704
    %v780 = vpop.permute.xlu0 %779
    %781 = vset.pattern.permute.xlu0 0
    %782 = vperm.xlu0 %781, %v705
    %v783 = vpop.permute.xlu0 %782
    %784 = vset.pattern.permute.xlu0 0
    %785 = vperm.xlu0 %784, %v706
    %v786 = vpop.permute.xlu0 %785
    %787 = vset.pattern.permute.xlu0 0
    %788 = vperm.xlu0 %787, %v707
    %v789 = vpop.permute.xlu0 %788
    %790 = vset.pattern.permute.xlu0 0
    %791 = vperm.xlu0 %790, %v708
    %v792 = vpop.permute.xlu0 %791
    %793 = vset.pattern.permute.xlu0 0
    %794 = vperm.xlu0 %793, %v709
    %v795 = vpop.permute.xlu0 %794
    %796 = vset.pattern.permute.xlu0 0
    %797 = vperm.xlu0 %796, %v710
    %v798 = vpop.permute.xlu0 %797
    %799 = vset.pattern.permute.xlu0 0
    %800 = vperm.xlu0 %799, %v711
    %v801 = vpop.permute.xlu0 %800
    %802 = vset.pattern.permute.xlu0 0
    %803 = vperm.xlu0 %802, %v712
    %v804 = vpop.permute.xlu0 %803
    %805 = vset.pattern.permute.xlu0 0
    %806 = vperm.xlu0 %805, %v713
    %v807 = vpop.permute.xlu0 %806
    %808 = vset.pattern.permute.xlu0 0
    %809 = vperm.xlu0 %808, %v714
    %v810 = vpop.permute.xlu0 %809
    %811 = vset.pattern.permute.xlu0 0
    %812 = vperm.xlu0 %811, %v715
    %v813 = vpop.permute.xlu0 %812
    %v814 = vshra.s32 %v720, %v717
    %v815 = vshra.s32 %v723, %v717
    %v816 = vshra.s32 %v726, %v717
    %v817 = vshra.s32 %v729, %v717
    %v818 = vshra.s32 %v732, %v717
    %v819 = vshra.s32 %v735, %v717
    %v820 = vshra.s32 %v738, %v717
    %v821 = vshra.s32 %v741, %v717
    %v822 = vshra.s32 %v744, %v717
    %v823 = vshra.s32 %v747, %v717
    %v824 = vshra.s32 %v750, %v717
    %v825 = vshra.s32 %v753, %v717
    %v826 = vshra.s32 %v756, %v717
    %v827 = vshra.s32 %v759, %v717
    %v828 = vshra.s32 %v762, %v717
    %v829 = vshra.s32 %v765, %v717
    %v830 = vshra.s32 %v768, %v717
    %v831 = vshra.s32 %v771, %v717
    %v832 = vshra.s32 %v774, %v717
    %v833 = vshra.s32 %v777, %v717
    %v834 = vshra.s32 %v780, %v717
    %v835 = vshra.s32 %v783, %v717
    %v836 = vshra.s32 %v786, %v717
    %v837 = vshra.s32 %v789, %v717
    %v838 = vshra.s32 %v792, %v717
    %v839 = vshra.s32 %v795, %v717
    %v840 = vshra.s32 %v798, %v717
    %v841 = vshra.s32 %v801, %v717
    %v842 = vshra.s32 %v804, %v717
    %v843 = vshra.s32 %v807, %v717
    %v844 = vshra.s32 %v810, %v717
    %v845 = vshra.s32 %v813, %v717
    %v846 = vand.u32 %v814, 1
    %v847 = vand.u32 %v815, 1
    %v848 = vand.u32 %v816, 1
    %v849 = vand.u32 %v817, 1
    %v850 = vand.u32 %v818, 1
    %v851 = vand.u32 %v819, 1
    %v852 = vand.u32 %v820, 1
    %v853 = vand.u32 %v821, 1
    %v854 = vand.u32 %v822, 1
    %v855 = vand.u32 %v823, 1
    %v856 = vand.u32 %v824, 1
    %v857 = vand.u32 %v825, 1
    %v858 = vand.u32 %v826, 1
    %v859 = vand.u32 %v827, 1
    %v860 = vand.u32 %v828, 1
    %v861 = vand.u32 %v829, 1
    %v862 = vand.u32 %v830, 1
    %v863 = vand.u32 %v831, 1
    %v864 = vand.u32 %v832, 1
    %v865 = vand.u32 %v833, 1
    %v866 = vand.u32 %v834, 1
    %v867 = vand.u32 %v835, 1
    %v868 = vand.u32 %v836, 1
    %v869 = vand.u32 %v837, 1
    %v870 = vand.u32 %v838, 1
    %v871 = vand.u32 %v839, 1
    %v872 = vand.u32 %v840, 1
    %v873 = vand.u32 %v841, 1
    %v874 = vand.u32 %v842, 1
    %v875 = vand.u32 %v843, 1
    %v876 = vand.u32 %v844, 1
    %v877 = vand.u32 %v845, 1
    %vm878 = vcmp.ne.s32.totalorder %v846, 0
    %vm879 = vcmp.ne.s32.totalorder %v847, 0
    %vm880 = vcmp.ne.s32.totalorder %v848, 0
    %vm881 = vcmp.ne.s32.totalorder %v849, 0
    %vm882 = vcmp.ne.s32.totalorder %v850, 0
    %vm883 = vcmp.ne.s32.totalorder %v851, 0
    %vm884 = vcmp.ne.s32.totalorder %v852, 0
    %vm885 = vcmp.ne.s32.totalorder %v853, 0
    %vm886 = vcmp.ne.s32.totalorder %v854, 0
    %vm887 = vcmp.ne.s32.totalorder %v855, 0
    %vm888 = vcmp.ne.s32.totalorder %v856, 0
    %vm889 = vcmp.ne.s32.totalorder %v857, 0
    %vm890 = vcmp.ne.s32.totalorder %v858, 0
    %vm891 = vcmp.ne.s32.totalorder %v859, 0
    %vm892 = vcmp.ne.s32.totalorder %v860, 0
    %vm893 = vcmp.ne.s32.totalorder %v861, 0
    %vm894 = vcmp.ne.s32.totalorder %v862, 0
    %vm895 = vcmp.ne.s32.totalorder %v863, 0
    %vm896 = vcmp.ne.s32.totalorder %v864, 0
    %vm897 = vcmp.ne.s32.totalorder %v865, 0
    %vm898 = vcmp.ne.s32.totalorder %v866, 0
    %vm899 = vcmp.ne.s32.totalorder %v867, 0
    %vm900 = vcmp.ne.s32.totalorder %v868, 0
    %vm901 = vcmp.ne.s32.totalorder %v869, 0
    %vm902 = vcmp.ne.s32.totalorder %v870, 0
    %vm903 = vcmp.ne.s32.totalorder %v871, 0
    %vm904 = vcmp.ne.s32.totalorder %v872, 0
    %vm905 = vcmp.ne.s32.totalorder %v873, 0
    %vm906 = vcmp.ne.s32.totalorder %v874, 0
    %vm907 = vcmp.ne.s32.totalorder %v875, 0
    %vm908 = vcmp.ne.s32.totalorder %v876, 0
    %vm909 = vcmp.ne.s32.totalorder %v877, 0
    %vm910 = vcmp.ge.s32.totalorder %v683, 8
    %vm911 = vmor %vm878, %vm910
    %vm912 = vmor %vm879, %vm910
    %vm913 = vmor %vm880, %vm910
    %vm914 = vmor %vm881, %vm910
    %vm915 = vmor %vm882, %vm910
    %vm916 = vmor %vm883, %vm910
    %vm917 = vmor %vm884, %vm910
    %vm918 = vmor %vm885, %vm910
    %vm919 = vmor %vm886, %vm910
    %vm920 = vmor %vm887, %vm910
    %vm921 = vmor %vm888, %vm910
    %vm922 = vmor %vm889, %vm910
    %vm923 = vmor %vm890, %vm910
    %vm924 = vmor %vm891, %vm910
    %vm925 = vmor %vm892, %vm910
    %vm926 = vmor %vm893, %vm910
    %vm927 = vmor %vm894, %vm910
    %vm928 = vmor %vm895, %vm910
    %vm929 = vmor %vm896, %vm910
    %vm930 = vmor %vm897, %vm910
    %vm931 = vmor %vm898, %vm910
    %vm932 = vmor %vm899, %vm910
    %vm933 = vmor %vm900, %vm910
    %vm934 = vmor %vm901, %vm910
    %vm935 = vmor %vm902, %vm910
    %vm936 = vmor %vm903, %vm910
    %vm937 = vmor %vm904, %vm910
    %vm938 = vmor %vm905, %vm910
    %vm939 = vmor %vm906, %vm910
    %vm940 = vmor %vm907, %vm910
    %vm941 = vmor %vm908, %vm910
    %vm942 = vmor %vm909, %vm910
    %v943 = vsel %vm911, -inf, %v556
    %v944 = vsel %vm912, -inf, %v559
    %v945 = vsel %vm913, -inf, %v564
    %v946 = vsel %vm914, -inf, %v567
    %v947 = vsel %vm915, -inf, %v572
    %v948 = vsel %vm916, -inf, %v575
    %v949 = vsel %vm917, -inf, %v580
    %v950 = vsel %vm918, -inf, %v583
    %v951 = vsel %vm919, -inf, %v588
    %v952 = vsel %vm920, -inf, %v591
    %v953 = vsel %vm921, -inf, %v596
    %v954 = vsel %vm922, -inf, %v599
    %v955 = vsel %vm923, -inf, %v604
    %v956 = vsel %vm924, -inf, %v607
    %v957 = vsel %vm925, -inf, %v612
    %v958 = vsel %vm926, -inf, %v615
    %v959 = vsel %vm927, -inf, %v620
    %v960 = vsel %vm928, -inf, %v623
    %v961 = vsel %vm929, -inf, %v628
    %v962 = vsel %vm930, -inf, %v631
    %v963 = vsel %vm931, -inf, %v636
    %v964 = vsel %vm932, -inf, %v639
    %v965 = vsel %vm933, -inf, %v644
    %v966 = vsel %vm934, -inf, %v647
    %v967 = vsel %vm935, -inf, %v652
    %v968 = vsel %vm936, -inf, %v655
    %v969 = vsel %vm937, -inf, %v660
    %v970 = vsel %vm938, -inf, %v663
    %v971 = vsel %vm939, -inf, %v668
    %v972 = vsel %vm940, -inf, %v671
    %v973 = vsel %vm941, -inf, %v676
    %v974 = vsel %vm942, -inf, %v679
    %975 = vmax.xlane.f32.xlu0 %v943
    %v976 = vpop.xlane.xlu0 %975
    %977 = vmax.xlane.f32.xlu0 %v944
    %v978 = vpop.xlane.xlu0 %977
    %979 = vmax.xlane.f32.xlu0 %v945
    %v980 = vpop.xlane.xlu0 %979
    %981 = vmax.xlane.f32.xlu0 %v946
    %v982 = vpop.xlane.xlu0 %981
    %983 = vmax.xlane.f32.xlu0 %v947
    %v984 = vpop.xlane.xlu0 %983
    %985 = vmax.xlane.f32.xlu0 %v948
    %v986 = vpop.xlane.xlu0 %985
    %987 = vmax.xlane.f32.xlu0 %v949
    %v988 = vpop.xlane.xlu0 %987
    %989 = vmax.xlane.f32.xlu0 %v950
    %v990 = vpop.xlane.xlu0 %989
    %991 = vmax.xlane.f32.xlu0 %v951
    %v992 = vpop.xlane.xlu0 %991
    %993 = vmax.xlane.f32.xlu0 %v952
    %v994 = vpop.xlane.xlu0 %993
    %995 = vmax.xlane.f32.xlu0 %v953
    %v996 = vpop.xlane.xlu0 %995
    %997 = vmax.xlane.f32.xlu0 %v954
    %v998 = vpop.xlane.xlu0 %997
    %999 = vmax.xlane.f32.xlu0 %v955
    %v1000 = vpop.xlane.xlu0 %999
    %1001 = vmax.xlane.f32.xlu0 %v956
    %v1002 = vpop.xlane.xlu0 %1001
    %1003 = vmax.xlane.f32.xlu0 %v957
    %v1004 = vpop.xlane.xlu0 %1003
    %1005 = vmax.xlane.f32.xlu0 %v958
    %v1006 = vpop.xlane.xlu0 %1005
    %1007 = vmax.xlane.f32.xlu0 %v959
    %v1008 = vpop.xlane.xlu0 %1007
    %1009 = vmax.xlane.f32.xlu0 %v960
    %v1010 = vpop.xlane.xlu0 %1009
    %1011 = vmax.xlane.f32.xlu0 %v961
    %v1012 = vpop.xlane.xlu0 %1011
    %1013 = vmax.xlane.f32.xlu0 %v962
    %v1014 = vpop.xlane.xlu0 %1013
    %1015 = vmax.xlane.f32.xlu0 %v963
    %v1016 = vpop.xlane.xlu0 %1015
    %1017 = vmax.xlane.f32.xlu0 %v964
    %v1018 = vpop.xlane.xlu0 %1017
    %1019 = vmax.xlane.f32.xlu0 %v965
    %v1020 = vpop.xlane.xlu0 %1019
    %1021 = vmax.xlane.f32.xlu0 %v966
    %v1022 = vpop.xlane.xlu0 %1021
    %1023 = vmax.xlane.f32.xlu0 %v967
    %v1024 = vpop.xlane.xlu0 %1023
    %1025 = vmax.xlane.f32.xlu0 %v968
    %v1026 = vpop.xlane.xlu0 %1025
    %1027 = vmax.xlane.f32.xlu0 %v969
    %v1028 = vpop.xlane.xlu0 %1027
    %1029 = vmax.xlane.f32.xlu0 %v970
    %v1030 = vpop.xlane.xlu0 %1029
    %1031 = vmax.xlane.f32.xlu0 %v971
    %v1032 = vpop.xlane.xlu0 %1031
    %1033 = vmax.xlane.f32.xlu0 %v972
    %v1034 = vpop.xlane.xlu0 %1033
    %1035 = vmax.xlane.f32.xlu0 %v973
    %v1036 = vpop.xlane.xlu0 %1035
    %1037 = vmax.xlane.f32.xlu0 %v974
    %v1038 = vpop.xlane.xlu0 %1037
    %v1039 = vsub.f32 %v943, %v976
    %v1040 = vsub.f32 %v944, %v978
    %v1041 = vsub.f32 %v945, %v980
    %v1042 = vsub.f32 %v946, %v982
    %v1043 = vsub.f32 %v947, %v984
    %v1044 = vsub.f32 %v948, %v986
    %v1045 = vsub.f32 %v949, %v988
    %v1046 = vsub.f32 %v950, %v990
    %v1047 = vsub.f32 %v951, %v992
    %v1048 = vsub.f32 %v952, %v994
    %v1049 = vsub.f32 %v953, %v996
    %v1050 = vsub.f32 %v954, %v998
    %v1051 = vsub.f32 %v955, %v1000
    %v1052 = vsub.f32 %v956, %v1002
    %v1053 = vsub.f32 %v957, %v1004
    %v1054 = vsub.f32 %v958, %v1006
    %v1055 = vsub.f32 %v959, %v1008
    %v1056 = vsub.f32 %v960, %v1010
    %v1057 = vsub.f32 %v961, %v1012
    %v1058 = vsub.f32 %v962, %v1014
    %v1059 = vsub.f32 %v963, %v1016
    %v1060 = vsub.f32 %v964, %v1018
    %v1061 = vsub.f32 %v965, %v1020
    %v1062 = vsub.f32 %v966, %v1022
    %v1063 = vsub.f32 %v967, %v1024
    %v1064 = vsub.f32 %v968, %v1026
    %v1065 = vsub.f32 %v969, %v1028
    %v1066 = vsub.f32 %v970, %v1030
    %v1067 = vsub.f32 %v971, %v1032
    %v1068 = vsub.f32 %v972, %v1034
    %v1069 = vsub.f32 %v973, %v1036
    %v1070 = vsub.f32 %v974, %v1038
    %v1071 = vmul.f32 %v1039, 1.442695
    %v1072 = vpow.pop %v1071
    %v1073 = vmul.f32 %v1040, 1.442695
    %v1074 = vpow.pop %v1073
    %v1075 = vmul.f32 %v1041, 1.442695
    %v1076 = vpow.pop %v1075
    %v1077 = vmul.f32 %v1042, 1.442695
    %v1078 = vpow.pop %v1077
    %v1079 = vmul.f32 %v1043, 1.442695
    %v1080 = vpow.pop %v1079
    %v1081 = vmul.f32 %v1044, 1.442695
    %v1082 = vpow.pop %v1081
    %v1083 = vmul.f32 %v1045, 1.442695
    %v1084 = vpow.pop %v1083
    %v1085 = vmul.f32 %v1046, 1.442695
    %v1086 = vpow.pop %v1085
    %v1087 = vmul.f32 %v1047, 1.442695
    %v1088 = vpow.pop %v1087
    %v1089 = vmul.f32 %v1048, 1.442695
    %v1090 = vpow.pop %v1089
    %v1091 = vmul.f32 %v1049, 1.442695
    %v1092 = vpow.pop %v1091
    %v1093 = vmul.f32 %v1050, 1.442695
    %v1094 = vpow.pop %v1093
    %v1095 = vmul.f32 %v1051, 1.442695
    %v1096 = vpow.pop %v1095
    %v1097 = vmul.f32 %v1052, 1.442695
    %v1098 = vpow.pop %v1097
    %v1099 = vmul.f32 %v1053, 1.442695
    %v1100 = vpow.pop %v1099
    %v1101 = vmul.f32 %v1054, 1.442695
    %v1102 = vpow.pop %v1101
    %v1103 = vmul.f32 %v1055, 1.442695
    %v1104 = vpow.pop %v1103
    %v1105 = vmul.f32 %v1056, 1.442695
    %v1106 = vpow.pop %v1105
    %v1107 = vmul.f32 %v1057, 1.442695
    %v1108 = vpow.pop %v1107
    %v1109 = vmul.f32 %v1058, 1.442695
    %v1110 = vpow.pop %v1109
    %v1111 = vmul.f32 %v1059, 1.442695
    %v1112 = vpow.pop %v1111
    %v1113 = vmul.f32 %v1060, 1.442695
    %v1114 = vpow.pop %v1113
    %v1115 = vmul.f32 %v1061, 1.442695
    %v1116 = vpow.pop %v1115
    %v1117 = vmul.f32 %v1062, 1.442695
    %v1118 = vpow.pop %v1117
    %v1119 = vmul.f32 %v1063, 1.442695
    %v1120 = vpow.pop %v1119
    %v1121 = vmul.f32 %v1064, 1.442695
    %v1122 = vpow.pop %v1121
    %v1123 = vmul.f32 %v1065, 1.442695
    %v1124 = vpow.pop %v1123
    %v1125 = vmul.f32 %v1066, 1.442695
    %v1126 = vpow.pop %v1125
    %v1127 = vmul.f32 %v1067, 1.442695
    %v1128 = vpow.pop %v1127
    %v1129 = vmul.f32 %v1068, 1.442695
    %v1130 = vpow.pop %v1129
    %v1131 = vmul.f32 %v1069, 1.442695
    %v1132 = vpow.pop %v1131
    %v1133 = vmul.f32 %v1070, 1.442695
    %v1134 = vpow.pop %v1133
    %1135 = vadd.xlane.f32.xlu0 %v1072
    %v1136 = vpop.xlane.xlu0 %1135
    %1137 = vadd.xlane.f32.xlu0 %v1074
    %v1138 = vpop.xlane.xlu0 %1137
    %1139 = vadd.xlane.f32.xlu0 %v1076
    %v1140 = vpop.xlane.xlu0 %1139
    %1141 = vadd.xlane.f32.xlu0 %v1078
    %v1142 = vpop.xlane.xlu0 %1141
    %1143 = vadd.xlane.f32.xlu0 %v1080
    %v1144 = vpop.xlane.xlu0 %1143
    %1145 = vadd.xlane.f32.xlu0 %v1082
    %v1146 = vpop.xlane.xlu0 %1145
    %1147 = vadd.xlane.f32.xlu0 %v1084
    %v1148 = vpop.xlane.xlu0 %1147
    %1149 = vadd.xlane.f32.xlu0 %v1086
    %v1150 = vpop.xlane.xlu0 %1149
    %1151 = vadd.xlane.f32.xlu0 %v1088
    %v1152 = vpop.xlane.xlu0 %1151
    %1153 = vadd.xlane.f32.xlu0 %v1090
    %v1154 = vpop.xlane.xlu0 %1153
    %1155 = vadd.xlane.f32.xlu0 %v1092
    %v1156 = vpop.xlane.xlu0 %1155
    %1157 = vadd.xlane.f32.xlu0 %v1094
    %v1158 = vpop.xlane.xlu0 %1157
    %1159 = vadd.xlane.f32.xlu0 %v1096
    %v1160 = vpop.xlane.xlu0 %1159
    %1161 = vadd.xlane.f32.xlu0 %v1098
    %v1162 = vpop.xlane.xlu0 %1161
    %1163 = vadd.xlane.f32.xlu0 %v1100
    %v1164 = vpop.xlane.xlu0 %1163
    %1165 = vadd.xlane.f32.xlu0 %v1102
    %v1166 = vpop.xlane.xlu0 %1165
    %1167 = vadd.xlane.f32.xlu0 %v1104
    %v1168 = vpop.xlane.xlu0 %1167
    %1169 = vadd.xlane.f32.xlu0 %v1106
    %v1170 = vpop.xlane.xlu0 %1169
    %1171 = vadd.xlane.f32.xlu0 %v1108
    %v1172 = vpop.xlane.xlu0 %1171
    %1173 = vadd.xlane.f32.xlu0 %v1110
    %v1174 = vpop.xlane.xlu0 %1173
    %1175 = vadd.xlane.f32.xlu0 %v1112
    %v1176 = vpop.xlane.xlu0 %1175
    %1177 = vadd.xlane.f32.xlu0 %v1114
    %v1178 = vpop.xlane.xlu0 %1177
    %1179 = vadd.xlane.f32.xlu0 %v1116
    %v1180 = vpop.xlane.xlu0 %1179
    %1181 = vadd.xlane.f32.xlu0 %v1118
    %v1182 = vpop.xlane.xlu0 %1181
    %1183 = vadd.xlane.f32.xlu0 %v1120
    %v1184 = vpop.xlane.xlu0 %1183
    %1185 = vadd.xlane.f32.xlu0 %v1122
    %v1186 = vpop.xlane.xlu0 %1185
    %1187 = vadd.xlane.f32.xlu0 %v1124
    %v1188 = vpop.xlane.xlu0 %1187
    %1189 = vadd.xlane.f32.xlu0 %v1126
    %v1190 = vpop.xlane.xlu0 %1189
    %1191 = vadd.xlane.f32.xlu0 %v1128
    %v1192 = vpop.xlane.xlu0 %1191
    %1193 = vadd.xlane.f32.xlu0 %v1130
    %v1194 = vpop.xlane.xlu0 %1193
    %1195 = vadd.xlane.f32.xlu0 %v1132
    %v1196 = vpop.xlane.xlu0 %1195
    %1197 = vadd.xlane.f32.xlu0 %v1134
    %v1198 = vpop.xlane.xlu0 %1197
    %v1199 = vlog2.pop %v1136
    %v1200 = vmul.f32 %v1199, 0.6931472
    %v1201 = vlog2.pop %v1138
    %v1202 = vmul.f32 %v1201, 0.6931472
    %v1203 = vlog2.pop %v1140
    %v1204 = vmul.f32 %v1203, 0.6931472
    %v1205 = vlog2.pop %v1142
    %v1206 = vmul.f32 %v1205, 0.6931472
    %v1207 = vlog2.pop %v1144
    %v1208 = vmul.f32 %v1207, 0.6931472
    %v1209 = vlog2.pop %v1146
    %v1210 = vmul.f32 %v1209, 0.6931472
    %v1211 = vlog2.pop %v1148
    %v1212 = vmul.f32 %v1211, 0.6931472
    %v1213 = vlog2.pop %v1150
    %v1214 = vmul.f32 %v1213, 0.6931472
    %v1215 = vlog2.pop %v1152
    %v1216 = vmul.f32 %v1215, 0.6931472
    %v1217 = vlog2.pop %v1154
    %v1218 = vmul.f32 %v1217, 0.6931472
    %v1219 = vlog2.pop %v1156
    %v1220 = vmul.f32 %v1219, 0.6931472
    %v1221 = vlog2.pop %v1158
    %v1222 = vmul.f32 %v1221, 0.6931472
    %v1223 = vlog2.pop %v1160
    %v1224 = vmul.f32 %v1223, 0.6931472
    %v1225 = vlog2.pop %v1162
    %v1226 = vmul.f32 %v1225, 0.6931472
    %v1227 = vlog2.pop %v1164
    %v1228 = vmul.f32 %v1227, 0.6931472
    %v1229 = vlog2.pop %v1166
    %v1230 = vmul.f32 %v1229, 0.6931472
    %v1231 = vlog2.pop %v1168
    %v1232 = vmul.f32 %v1231, 0.6931472
    %v1233 = vlog2.pop %v1170
    %v1234 = vmul.f32 %v1233, 0.6931472
    %v1235 = vlog2.pop %v1172
    %v1236 = vmul.f32 %v1235, 0.6931472
    %v1237 = vlog2.pop %v1174
    %v1238 = vmul.f32 %v1237, 0.6931472
    %v1239 = vlog2.pop %v1176
    %v1240 = vmul.f32 %v1239, 0.6931472
    %v1241 = vlog2.pop %v1178
    %v1242 = vmul.f32 %v1241, 0.6931472
    %v1243 = vlog2.pop %v1180
    %v1244 = vmul.f32 %v1243, 0.6931472
    %v1245 = vlog2.pop %v1182
    %v1246 = vmul.f32 %v1245, 0.6931472
    %v1247 = vlog2.pop %v1184
    %v1248 = vmul.f32 %v1247, 0.6931472
    %v1249 = vlog2.pop %v1186
    %v1250 = vmul.f32 %v1249, 0.6931472
    %v1251 = vlog2.pop %v1188
    %v1252 = vmul.f32 %v1251, 0.6931472
    %v1253 = vlog2.pop %v1190
    %v1254 = vmul.f32 %v1253, 0.6931472
    %v1255 = vlog2.pop %v1192
    %v1256 = vmul.f32 %v1255, 0.6931472
    %v1257 = vlog2.pop %v1194
    %v1258 = vmul.f32 %v1257, 0.6931472
    %v1259 = vlog2.pop %v1196
    %v1260 = vmul.f32 %v1259, 0.6931472
    %v1261 = vlog2.pop %v1198
    %v1262 = vmul.f32 %v1261, 0.6931472
    %v1263 = vadd.f32 %v1200, %v976
    %v1264 = vadd.f32 %v1202, %v978
    %v1265 = vadd.f32 %v1204, %v980
    %v1266 = vadd.f32 %v1206, %v982
    %v1267 = vadd.f32 %v1208, %v984
    %v1268 = vadd.f32 %v1210, %v986
    %v1269 = vadd.f32 %v1212, %v988
    %v1270 = vadd.f32 %v1214, %v990
    %v1271 = vadd.f32 %v1216, %v992
    %v1272 = vadd.f32 %v1218, %v994
    %v1273 = vadd.f32 %v1220, %v996
    %v1274 = vadd.f32 %v1222, %v998
    %v1275 = vadd.f32 %v1224, %v1000
    %v1276 = vadd.f32 %v1226, %v1002
    %v1277 = vadd.f32 %v1228, %v1004
    %v1278 = vadd.f32 %v1230, %v1006
    %v1279 = vadd.f32 %v1232, %v1008
    %v1280 = vadd.f32 %v1234, %v1010
    %v1281 = vadd.f32 %v1236, %v1012
    %v1282 = vadd.f32 %v1238, %v1014
    %v1283 = vadd.f32 %v1240, %v1016
    %v1284 = vadd.f32 %v1242, %v1018
    %v1285 = vadd.f32 %v1244, %v1020
    %v1286 = vadd.f32 %v1246, %v1022
    %v1287 = vadd.f32 %v1248, %v1024
    %v1288 = vadd.f32 %v1250, %v1026
    %v1289 = vadd.f32 %v1252, %v1028
    %v1290 = vadd.f32 %v1254, %v1030
    %v1291 = vadd.f32 %v1256, %v1032
    %v1292 = vadd.f32 %v1258, %v1034
    %v1293 = vadd.f32 %v1260, %v1036
    %v1294 = vadd.f32 %v1262, %v1038
    %v1295 = vsub.f32 %v943, %v1263
    %v1296 = vsub.f32 %v944, %v1264
    %v1297 = vsub.f32 %v945, %v1265
    %v1298 = vsub.f32 %v946, %v1266
    %v1299 = vsub.f32 %v947, %v1267
    %v1300 = vsub.f32 %v948, %v1268
    %v1301 = vsub.f32 %v949, %v1269
    %v1302 = vsub.f32 %v950, %v1270
    %v1303 = vsub.f32 %v951, %v1271
    %v1304 = vsub.f32 %v952, %v1272
    %v1305 = vsub.f32 %v953, %v1273
    %v1306 = vsub.f32 %v954, %v1274
    %v1307 = vsub.f32 %v955, %v1275
    %v1308 = vsub.f32 %v956, %v1276
    %v1309 = vsub.f32 %v957, %v1277
    %v1310 = vsub.f32 %v958, %v1278
    %v1311 = vsub.f32 %v959, %v1279
    %v1312 = vsub.f32 %v960, %v1280
    %v1313 = vsub.f32 %v961, %v1281
    %v1314 = vsub.f32 %v962, %v1282
    %v1315 = vsub.f32 %v963, %v1283
    %v1316 = vsub.f32 %v964, %v1284
    %v1317 = vsub.f32 %v965, %v1285
    %v1318 = vsub.f32 %v966, %v1286
    %v1319 = vsub.f32 %v967, %v1287
    %v1320 = vsub.f32 %v968, %v1288
    %v1321 = vsub.f32 %v969, %v1289
    %v1322 = vsub.f32 %v970, %v1290
    %v1323 = vsub.f32 %v971, %v1291
    %v1324 = vsub.f32 %v972, %v1292
    %v1325 = vsub.f32 %v973, %v1293
    %v1326 = vsub.f32 %v974, %v1294
    %1327 = vst [vmem:[#allocation2] sm:$0xff] %v1295
    %1328 = vst [vmem:[#allocation2 + $0x8] sm:$0xff] %v1296
    %1329 = vst [vmem:[#allocation2 + $0x10] sm:$0xff] %v1297
    %1330 = vst [vmem:[#allocation2 + $0x18] sm:$0xff] %v1298
    %1331 = vst [vmem:[#allocation2 + $0x20] sm:$0xff] %v1299
    %1332 = vst [vmem:[#allocation2 + $0x28] sm:$0xff] %v1300
    %1333 = vst [vmem:[#allocation2 + $0x30] sm:$0xff] %v1301
    %1334 = vst [vmem:[#allocation2 + $0x38] sm:$0xff] %v1302
    %1335 = vst [vmem:[#allocation2 + $0x40] sm:$0xff] %v1303
    %1336 = vst [vmem:[#allocation2 + $0x48] sm:$0xff] %v1304
    %1337 = vst [vmem:[#allocation2 + $0x50] sm:$0xff] %v1305
    %1338 = vst [vmem:[#allocation2 + $0x58] sm:$0xff] %v1306
    %1339 = vst [vmem:[#allocation2 + $0x60] sm:$0xff] %v1307
    %1340 = vst [vmem:[#allocation2 + $0x68] sm:$0xff] %v1308
    %1341 = vst [vmem:[#allocation2 + $0x70] sm:$0xff] %v1309
    %1342 = vst [vmem:[#allocation2 + $0x78] sm:$0xff] %v1310
    %1343 = vst [vmem:[#allocation2 + $0x80] sm:$0xff] %v1311
    %1344 = vst [vmem:[#allocation2 + $0x88] sm:$0xff] %v1312
    %1345 = vst [vmem:[#allocation2 + $0x90] sm:$0xff] %v1313
    %1346 = vst [vmem:[#allocation2 + $0x98] sm:$0xff] %v1314
    %1347 = vst [vmem:[#allocation2 + $0xa0] sm:$0xff] %v1315
    %1348 = vst [vmem:[#allocation2 + $0xa8] sm:$0xff] %v1316
    %1349 = vst [vmem:[#allocation2 + $0xb0] sm:$0xff] %v1317
    %1350 = vst [vmem:[#allocation2 + $0xb8] sm:$0xff] %v1318
    %1351 = vst [vmem:[#allocation2 + $0xc0] sm:$0xff] %v1319
    %1352 = vst [vmem:[#allocation2 + $0xc8] sm:$0xff] %v1320
    %1353 = vst [vmem:[#allocation2 + $0xd0] sm:$0xff] %v1321
    %1354 = vst [vmem:[#allocation2 + $0xd8] sm:$0xff] %v1322
    %1355 = vst [vmem:[#allocation2 + $0xe0] sm:$0xff] %v1323
    %1356 = vst [vmem:[#allocation2 + $0xe8] sm:$0xff] %v1324
    %1357 = vst [vmem:[#allocation2 + $0xf0] sm:$0xff] %v1325
    %1358 = vst [vmem:[#allocation2 + $0xf8] sm:$0xff] %v1326
    // Predicated region
    $region26: #{tpu_custom_call.1} parent=1 // pred_check
      _
    $region27: #{tpu_custom_call.1} parent=1 // pred_check_branch
      %1360 = sbr.rel (0) target = $region29
    $region28: #{tpu_custom_call.1} parent=1 // pred_region
      %s1362 = ssub.s32 4096, 4096
      %1363 = vsyncadd [#allocation3], %s1362
      %s1364 = sshll.u32 [#allocation2], 4
      %s1365 = int_to_ptr.vmem [resolvable:$true] %s1364
      %1370 = dma.vmem_to_hbm [thread:$0]  %s1365, 4096, %s6, [#allocation3], 128, 128, 8
    $region29: #{tpu_custom_call.1} parent=1 // pred_fallthru
      _
    // Predicated region
    $region30: #{tpu_custom_call.1} parent=1 // pred_check
      _
    $region31: #{tpu_custom_call.1} parent=1 // pred_check_branch
      %1372 = sbr.rel (0) target = $region33
    $region32: #{tpu_custom_call.1} parent=1 // pred_region
      %1373 = dma.done [#allocation3], 4096
    $region33: #{tpu_custom_call.1} parent=1 // pred_fallthru
      _
    %1374 = vsyncpa [#allocation3], 1

</llo_original>
